<compile_context>
chip_gen: v7x
topology: tpu7x:2x2x1
jax: 0.10.0
libtpu: 0.0.40
codegen_flags: <defaults>
</compile_context>

<pallas_src>
import functools

import jax
import jax.numpy as jnp
from jax.experimental import pallas as pl
from jax.experimental.pallas import tpu as pltpu

# SELU constants (match torch.nn.SELU)
_SELU_ALPHA = 1.6732632423543772848170429916717
_SELU_SCALE = 1.0507009873554804934193349852946
_SELU_SCALE_ALPHA = _SELU_SCALE * _SELU_ALPHA


def _selu(z):
    # scale * where(z > 0, z, alpha * (exp(z) - 1)), constants folded.
    # exp(min(z, 0)) keeps the untaken branch finite (autodiff-safe).
    neg = _SELU_SCALE_ALPHA * jnp.exp(jnp.minimum(z, 0.0)) - _SELU_SCALE_ALPHA
    return jnp.where(z > 0, _SELU_SCALE * z, neg)


def timescorenet_kernel(x_ref, t_ref, wx_ref, wt_ref, bin_ref,
                        wh_ref, bh_ref, wout_ref, bout_ref, out_ref,
                        *, matmul_dtype):
    mm = matmul_dtype

    # Input layer: cat([x, t]) @ W_in + b_in without materializing the concat:
    #   (TB, Din) @ (Din, H) on the MXU  +  t * W_in[t-row] (rank-1, VPU)  + b_in
    h = (jnp.dot(x_ref[...].astype(mm), wx_ref[...],
                 preferred_element_type=jnp.float32)
         + t_ref[...] * wt_ref[...]
         + bin_ref[...])

    # Residual hidden stack — statically unrolled; wh_ref[l]/bh_ref[l] are
    # zero-cost static views.
    num_layers = wh_ref.shape[0]
    for l in range(num_layers):
        z = jnp.dot(h.astype(mm), wh_ref[l],
                    preferred_element_type=jnp.float32) + bh_ref[l]
        h = _selu(z) + h

    # Output layer into a compact (TB, input_dim) block (last dim == full array
    # dim) -> writes only the bytes actually needed, no wrapper feature slice.
    out_ref[...] = (jnp.dot(h.astype(mm), wout_ref[...],
                            preferred_element_type=jnp.float32)
                    + bout_ref[...]).astype(out_ref.dtype)


def _round_up(a, m):
    return ((a + m - 1) // m) * m


def timescorenet_forward(x, t, params, *, batch_tile=2048,
                         matmul_dtype=jnp.bfloat16):
    """x: (B, input_dim), t: (B, 1) -> (B, input_dim).

    matmul_dtype=jnp.bfloat16 runs MXU matmuls with bf16 operands / f32
    accumulation (fast path, ~1e-2 tolerance); jnp.float32 is exact.
    """
    w_in, b_in, w_h, b_h, w_out, b_out = (
        params["w_in"], params["b_in"], params["w_h"],
        params["b_h"], params["w_out"], params["b_out"])

    B, input_dim = x.shape
    din, hidden_dim = w_in.shape          # din = input_dim + 1
    assert din == input_dim + 1
    num_layers = w_h.shape[0]

    # --- Batch tile selection: multiple of 8, pad B up to a whole number of
    # tiles, prefer an even grid length (>1) for v7x megacore sharding. -------
    TB = min(batch_tile, _round_up(B, 8))
    TB = max(8, (TB // 8) * 8)
    nb = (B + TB - 1) // TB
    if nb > 1 and nb % 2 == 1:
        nb += 1
        TB = max(8, _round_up((B + nb - 1) // nb, 8))
        nb = (B + TB - 1) // TB
    B_pad = nb * TB

    if B_pad != B:
        x = jnp.pad(x, ((0, B_pad - B), (0, 0)))
        t = jnp.pad(t, ((0, B_pad - B), (0, 0)))

    # --- Weight prep: split W_in into x-part and t-row (replaces the concat);
    # cast MXU operands once in the wrapper. ----------------------------------
    w_in_x = w_in[:input_dim, :].astype(matmul_dtype)   # (input_dim, H)
    w_in_t = w_in[input_dim:, :]                         # (1, H)  f32, VPU rank-1
    w_h_mm = w_h.astype(matmul_dtype)                    # (L, H, H)
    w_out_mm = w_out.astype(matmul_dtype)                # (H, input_dim)

    mm_bytes = jnp.dtype(matmul_dtype).itemsize

    # --- Advisory cost estimate for the surrounding XLA schedule. ------------
    flops = (2 * B_pad * hidden_dim * input_dim                     # input matmul
             + 3 * B_pad * hidden_dim                               # rank-1 + bias
             + num_layers * (2 * B_pad * hidden_dim * hidden_dim    # hidden matmuls
                             + 6 * B_pad * hidden_dim)              # bias/SELU/residual
             + 2 * B_pad * hidden_dim * input_dim                   # output matmul
             + B_pad * input_dim)
    transc = B_pad * hidden_dim * num_layers                        # exp per element
    bytes_acc = (4 * B_pad * (input_dim + 1 + input_dim)            # x, t, out
                 + mm_bytes * (input_dim * hidden_dim
                               + num_layers * hidden_dim * hidden_dim
                               + hidden_dim * input_dim)
                 + 4 * (hidden_dim * 2 + num_layers * hidden_dim + input_dim))

    # --- Scoped-VMEM limit: estimate + margin, clamped to [32 MiB, 56 MiB]
    # (safe on v5e/v6e's 128 MiB and v7x's 64 MiB physical VMEM). -------------
    weight_vmem = (mm_bytes * (input_dim * hidden_dim
                               + num_layers * hidden_dim * hidden_dim
                               + hidden_dim * input_dim)
                   + 4 * (2 * hidden_dim + num_layers * hidden_dim + input_dim))
    tile_vmem = 4 * TB * (2 * input_dim + 1)
    temp_vmem = 4 * TB * hidden_dim * 4                 # h, z, SELU temporaries
    vmem_est = 2 * (weight_vmem + tile_vmem) + temp_vmem
    vmem_limit = int(min(56 * 2**20, max(32 * 2**20, 2 * vmem_est)))

    kernel = functools.partial(timescorenet_kernel, matmul_dtype=matmul_dtype)

    out = pl.pallas_call(
        kernel,
        out_shape=jax.ShapeDtypeStruct((B_pad, input_dim), jnp.float32),
        grid=(nb,),
        in_specs=[
            pl.BlockSpec((TB, input_dim), lambda i: (i, 0)),           # x tile
            pl.BlockSpec((TB, 1), lambda i: (i, 0)),                   # t tile
            pl.BlockSpec((input_dim, hidden_dim), lambda i: (0, 0)),   # W_in (x rows)
            pl.BlockSpec((1, hidden_dim), lambda i: (0, 0)),           # W_in (t row)
            pl.BlockSpec((1, hidden_dim), lambda i: (0, 0)),           # b_in
            pl.BlockSpec((num_layers, hidden_dim, hidden_dim),
                         lambda i: (0, 0, 0)),                         # W_h
            pl.BlockSpec((num_layers, 1, hidden_dim),
                         lambda i: (0, 0, 0)),                         # b_h
            pl.BlockSpec((hidden_dim, input_dim), lambda i: (0, 0)),   # W_out
            pl.BlockSpec((1, input_dim), lambda i: (0, 0)),            # b_out
        ],
        out_specs=pl.BlockSpec((TB, input_dim), lambda i: (i, 0)),
        compiler_params=pltpu.CompilerParams(
            dimension_semantics=("parallel",),
            vmem_limit_bytes=vmem_limit),
        cost_estimate=pl.CostEstimate(
            flops=int(flops),
            transcendentals=int(transc),
            bytes_accessed=int(bytes_acc)),
    )(x, t, w_in_x, w_in_t, b_in, w_h_mm, b_h, w_out_mm, b_out)

    if B_pad != B:
        out = out[:B]
    return out


def init_params(key, input_dim, hidden_dim, num_layers):
    """Deterministic synthetic parameters (shapes follow the nn.Module __init__).

    Weights are stored transposed relative to PyTorch's nn.Linear: (in, out),
    so y = x @ W + b.
    """
    din = input_dim + 1
    k = jax.random.split(key, 6)
    s_in = 1.0 / jnp.sqrt(jnp.float32(din))
    s_h = 1.0 / jnp.sqrt(jnp.float32(hidden_dim))

    w_in = jax.random.uniform(k[0], (din, hidden_dim), jnp.float32, -s_in, s_in)
    b_in = jax.random.uniform(k[1], (1, hidden_dim), jnp.float32, -s_in, s_in)

    w_h = jax.random.uniform(k[2], (num_layers, hidden_dim, hidden_dim),
                             jnp.float32, -s_h, s_h)
    b_h = jax.random.uniform(k[3], (num_layers, 1, hidden_dim),
                             jnp.float32, -s_h, s_h)

    w_out = jax.random.uniform(k[4], (hidden_dim, input_dim), jnp.float32, -s_h, s_h)
    b_out = jax.random.uniform(k[5], (1, input_dim), jnp.float32, -s_h, s_h)

    return dict(w_in=w_in, b_in=b_in, w_h=w_h, b_h=b_h, w_out=w_out, b_out=b_out)


def reference_forward(x, t, params):
    """Pure-JAX f32 reference mirroring the PyTorch forward."""
    inp = jnp.concatenate([x, t], axis=1)
    out = inp @ params["w_in"] + params["b_in"]
    for l in range(params["w_h"].shape[0]):
        residual = out
        out = out @ params["w_h"][l] + params["b_h"][l]
        out = _selu(out)
        out = out + residual
    return out @ params["w_out"] + params["b_out"]


if __name__ == "__main__":
    # Small shapes consistent with the module's forward.  batch=60 with
    # batch_tile=24 exercises the non-divisible case: tile is re-derived to
    # TB=16, grid=(4,) (even), batch padded 60 -> 64 and sliced back.
    batch = 60
    input_dim = 16
    hidden_dim = 128
    num_layers = 4

    key = jax.random.PRNGKey(0)
    kx, kt, kp = jax.random.split(key, 3)

    x = jax.random.normal(kx, (batch, input_dim), jnp.float32)
    t = jax.random.uniform(kt, (batch, 1), jnp.float32)
    params = init_params(kp, input_dim, hidden_dim, num_layers)

    ref = reference_forward(x, t, params)

    # Exact-semantics path (f32 MXU operands) — tight tolerance.
    out_f32 = jax.block_until_ready(
        timescorenet_forward(x, t, params, batch_tile=24,
                             matmul_dtype=jnp.float32))
    assert out_f32.shape == (batch, input_dim)
    assert jnp.allclose(out_f32, ref, atol=1e-4, rtol=1e-4), "f32 mismatch vs reference"

    # Fast path (bf16 MXU operands, f32 accumulation) — looser tolerance.
    out_bf16 = jax.block_until_ready(
        timescorenet_forward(x, t, params, batch_tile=24,
                             matmul_dtype=jnp.bfloat16))
    assert out_bf16.shape == (batch, input_dim)
    assert jnp.allclose(out_bf16, ref, atol=7e-2, rtol=5e-2), "bf16 mismatch vs reference"

    print("KERNEL_OK")
</pallas_src>

<mosaic_0001>
module attributes {stable_mosaic.version = 11 : i64} {
  func.func @timescorenet_kernel(%arg0: i32, %arg1: memref<16x16xf32, #tpu.memory_space<vmem>>, %arg2: memref<16x1xf32, #tpu.memory_space<vmem>>, %arg3: memref<16x128xf32, #tpu.memory_space<vmem>>, %arg4: memref<1x128xf32, #tpu.memory_space<vmem>>, %arg5: memref<1x128xf32, #tpu.memory_space<vmem>>, %arg6: memref<4x128x128xf32, #tpu.memory_space<vmem>>, %arg7: memref<4x1x128xf32, #tpu.memory_space<vmem>>, %arg8: memref<128x16xf32, #tpu.memory_space<vmem>>, %arg9: memref<1x16xf32, #tpu.memory_space<vmem>>, %arg10: memref<16x16xf32, #tpu.memory_space<vmem>>) attributes {dimension_semantics = [#tpu.dimension_semantics<parallel>], iteration_bounds = array<i64: 4>, scalar_prefetch = 0 : i64, scratch_operands = 0 : i64, tpu.core_type = #tpu.core_type<tc>, window_params = [{transform_indices = @transform_0, window_bounds = array<i64: 16, 16>}, {transform_indices = @transform_1, window_bounds = array<i64: 16, 1>}, {pipeline_mode = #tpu.pipeline_mode<synchronous>, transform_indices = @transform_2, window_bounds = array<i64: 16, 128>}, {pipeline_mode = #tpu.pipeline_mode<synchronous>, transform_indices = @transform_3, window_bounds = array<i64: 1, 128>}, {pipeline_mode = #tpu.pipeline_mode<synchronous>, transform_indices = @transform_4, window_bounds = array<i64: 1, 128>}, {pipeline_mode = #tpu.pipeline_mode<synchronous>, transform_indices = @transform_5, window_bounds = array<i64: 4, 128, 128>}, {pipeline_mode = #tpu.pipeline_mode<synchronous>, transform_indices = @transform_6, window_bounds = array<i64: 4, 1, 128>}, {pipeline_mode = #tpu.pipeline_mode<synchronous>, transform_indices = @transform_7, window_bounds = array<i64: 128, 16>}, {pipeline_mode = #tpu.pipeline_mode<synchronous>, transform_indices = @transform_8, window_bounds = array<i64: 1, 16>}, {transform_indices = @transform_9, window_bounds = array<i64: 16, 16>}]} {
    %c0 = arith.constant 0 : index
    %c0_0 = arith.constant 0 : index
    %0 = vector.load %arg1[%c0, %c0_0] : memref<16x16xf32, #tpu.memory_space<vmem>>, vector<16x16xf32>
    %c0_1 = arith.constant 0 : index
    %c0_2 = arith.constant 0 : index
    %1 = vector.load %arg3[%c0_1, %c0_2] : memref<16x128xf32, #tpu.memory_space<vmem>>, vector<16x128xf32>
    %cst = arith.constant dense<0.000000e+00> : vector<16x128xf32>
    %2 = tpu.matmul %0, %1, %cst {dimension_numbers = #tpu.dot_dimension_numbers<[1], [0], [0], [1], [0, 0, 1, 1], [], []>} : vector<16x16xf32>, vector<16x128xf32>, vector<16x128xf32> -> vector<16x128xf32>
    %c0_3 = arith.constant 0 : index
    %c0_4 = arith.constant 0 : index
    %3 = vector.load %arg2[%c0_3, %c0_4] : memref<16x1xf32, #tpu.memory_space<vmem>>, vector<16x1xf32>
    %c0_5 = arith.constant 0 : index
    %c0_6 = arith.constant 0 : index
    %4 = vector.load %arg4[%c0_5, %c0_6] : memref<1x128xf32, #tpu.memory_space<vmem>>, vector<1x128xf32>
    %5 = vector.broadcast %3 : vector<16x1xf32> to vector<16x128xf32>
    %6 = vector.broadcast %4 : vector<1x128xf32> to vector<16x128xf32>
    %7 = arith.mulf %5, %6 : vector<16x128xf32>
    %8 = arith.addf %2, %7 : vector<16x128xf32>
    %c0_7 = arith.constant 0 : index
    %c0_8 = arith.constant 0 : index
    %9 = vector.load %arg5[%c0_7, %c0_8] : memref<1x128xf32, #tpu.memory_space<vmem>>, vector<1x128xf32>
    %10 = vector.broadcast %9 : vector<1x128xf32> to vector<16x128xf32>
    %11 = arith.addf %8, %10 : vector<16x128xf32>
    %c0_9 = arith.constant 0 : index
    %c0_10 = arith.constant 0 : index
    %c0_11 = arith.constant 0 : index
    %12 = vector.load %arg6[%c0_9, %c0_10, %c0_11] : memref<4x128x128xf32, #tpu.memory_space<vmem>>, vector<1x128x128xf32>
    %13 = vector.shape_cast %12 : vector<1x128x128xf32> to vector<128x128xf32>
    %cst_12 = arith.constant dense<0.000000e+00> : vector<16x128xf32>
    %14 = tpu.matmul %11, %13, %cst_12 {dimension_numbers = #tpu.dot_dimension_numbers<[1], [0], [0], [1], [0, 0, 1, 1], [], []>} : vector<16x128xf32>, vector<128x128xf32>, vector<16x128xf32> -> vector<16x128xf32>
    %c0_13 = arith.constant 0 : index
    %c0_14 = arith.constant 0 : index
    %c0_15 = arith.constant 0 : index
    %15 = vector.load %arg7[%c0_13, %c0_14, %c0_15] : memref<4x1x128xf32, #tpu.memory_space<vmem>>, vector<1x1x128xf32>
    %16 = vector.shape_cast %15 : vector<1x1x128xf32> to vector<1x128xf32>
    %17 = vector.broadcast %16 : vector<1x128xf32> to vector<16x128xf32>
    %18 = arith.addf %14, %17 : vector<16x128xf32>
    %cst_16 = arith.constant 0.000000e+00 : f32
    %19 = vector.broadcast %cst_16 : f32 to vector<16x128xf32>
    %20 = arith.minimumf %18, %19 : vector<16x128xf32>
    %21 = math.exp %20 : vector<16x128xf32>
    %cst_17 = arith.constant 1.75809932 : f32
    %22 = vector.broadcast %cst_17 : f32 to vector<16x128xf32>
    %23 = arith.mulf %22, %21 : vector<16x128xf32>
    %cst_18 = arith.constant 1.75809932 : f32
    %24 = vector.broadcast %cst_18 : f32 to vector<16x128xf32>
    %25 = arith.subf %23, %24 : vector<16x128xf32>
    %cst_19 = arith.constant 0.000000e+00 : f32
    %26 = vector.broadcast %cst_19 : f32 to vector<16x128xf32>
    %27 = arith.cmpf ogt, %18, %26 : vector<16x128xf32>
    %cst_20 = arith.constant 1.05070102 : f32
    %28 = vector.broadcast %cst_20 : f32 to vector<16x128xf32>
    %29 = arith.mulf %28, %18 : vector<16x128xf32>
    %30 = arith.select %27, %29, %25 : vector<16x128xi1>, vector<16x128xf32>
    %31 = arith.addf %30, %11 : vector<16x128xf32>
    %c1 = arith.constant 1 : index
    %c0_21 = arith.constant 0 : index
    %c0_22 = arith.constant 0 : index
    %32 = vector.load %arg6[%c1, %c0_21, %c0_22] : memref<4x128x128xf32, #tpu.memory_space<vmem>>, vector<1x128x128xf32>
    %33 = vector.shape_cast %32 : vector<1x128x128xf32> to vector<128x128xf32>
    %cst_23 = arith.constant dense<0.000000e+00> : vector<16x128xf32>
    %34 = tpu.matmul %31, %33, %cst_23 {dimension_numbers = #tpu.dot_dimension_numbers<[1], [0], [0], [1], [0, 0, 1, 1], [], []>} : vector<16x128xf32>, vector<128x128xf32>, vector<16x128xf32> -> vector<16x128xf32>
    %c1_24 = arith.constant 1 : index
    %c0_25 = arith.constant 0 : index
    %c0_26 = arith.constant 0 : index
    %35 = vector.load %arg7[%c1_24, %c0_25, %c0_26] : memref<4x1x128xf32, #tpu.memory_space<vmem>>, vector<1x1x128xf32>
    %36 = vector.shape_cast %35 : vector<1x1x128xf32> to vector<1x128xf32>
    %37 = vector.broadcast %36 : vector<1x128xf32> to vector<16x128xf32>
    %38 = arith.addf %34, %37 : vector<16x128xf32>
    %cst_27 = arith.constant 0.000000e+00 : f32
    %39 = vector.broadcast %cst_27 : f32 to vector<16x128xf32>
    %40 = arith.minimumf %38, %39 : vector<16x128xf32>
    %41 = math.exp %40 : vector<16x128xf32>
    %cst_28 = arith.constant 1.75809932 : f32
    %42 = vector.broadcast %cst_28 : f32 to vector<16x128xf32>
    %43 = arith.mulf %42, %41 : vector<16x128xf32>
    %cst_29 = arith.constant 1.75809932 : f32
    %44 = vector.broadcast %cst_29 : f32 to vector<16x128xf32>
    %45 = arith.subf %43, %44 : vector<16x128xf32>
    %cst_30 = arith.constant 0.000000e+00 : f32
    %46 = vector.broadcast %cst_30 : f32 to vector<16x128xf32>
    %47 = arith.cmpf ogt, %38, %46 : vector<16x128xf32>
    %cst_31 = arith.constant 1.05070102 : f32
    %48 = vector.broadcast %cst_31 : f32 to vector<16x128xf32>
    %49 = arith.mulf %48, %38 : vector<16x128xf32>
    %50 = arith.select %47, %49, %45 : vector<16x128xi1>, vector<16x128xf32>
    %51 = arith.addf %50, %31 : vector<16x128xf32>
    %c2 = arith.constant 2 : index
    %c0_32 = arith.constant 0 : index
    %c0_33 = arith.constant 0 : index
    %52 = vector.load %arg6[%c2, %c0_32, %c0_33] : memref<4x128x128xf32, #tpu.memory_space<vmem>>, vector<1x128x128xf32>
    %53 = vector.shape_cast %52 : vector<1x128x128xf32> to vector<128x128xf32>
    %cst_34 = arith.constant dense<0.000000e+00> : vector<16x128xf32>
    %54 = tpu.matmul %51, %53, %cst_34 {dimension_numbers = #tpu.dot_dimension_numbers<[1], [0], [0], [1], [0, 0, 1, 1], [], []>} : vector<16x128xf32>, vector<128x128xf32>, vector<16x128xf32> -> vector<16x128xf32>
    %c2_35 = arith.constant 2 : index
    %c0_36 = arith.constant 0 : index
    %c0_37 = arith.constant 0 : index
    %55 = vector.load %arg7[%c2_35, %c0_36, %c0_37] : memref<4x1x128xf32, #tpu.memory_space<vmem>>, vector<1x1x128xf32>
    %56 = vector.shape_cast %55 : vector<1x1x128xf32> to vector<1x128xf32>
    %57 = vector.broadcast %56 : vector<1x128xf32> to vector<16x128xf32>
    %58 = arith.addf %54, %57 : vector<16x128xf32>
    %cst_38 = arith.constant 0.000000e+00 : f32
    %59 = vector.broadcast %cst_38 : f32 to vector<16x128xf32>
    %60 = arith.minimumf %58, %59 : vector<16x128xf32>
    %61 = math.exp %60 : vector<16x128xf32>
    %cst_39 = arith.constant 1.75809932 : f32
    %62 = vector.broadcast %cst_39 : f32 to vector<16x128xf32>
    %63 = arith.mulf %62, %61 : vector<16x128xf32>
    %cst_40 = arith.constant 1.75809932 : f32
    %64 = vector.broadcast %cst_40 : f32 to vector<16x128xf32>
    %65 = arith.subf %63, %64 : vector<16x128xf32>
    %cst_41 = arith.constant 0.000000e+00 : f32
    %66 = vector.broadcast %cst_41 : f32 to vector<16x128xf32>
    %67 = arith.cmpf ogt, %58, %66 : vector<16x128xf32>
    %cst_42 = arith.constant 1.05070102 : f32
    %68 = vector.broadcast %cst_42 : f32 to vector<16x128xf32>
    %69 = arith.mulf %68, %58 : vector<16x128xf32>
    %70 = arith.select %67, %69, %65 : vector<16x128xi1>, vector<16x128xf32>
    %71 = arith.addf %70, %51 : vector<16x128xf32>
    %c3 = arith.constant 3 : index
    %c0_43 = arith.constant 0 : index
    %c0_44 = arith.constant 0 : index
    %72 = vector.load %arg6[%c3, %c0_43, %c0_44] : memref<4x128x128xf32, #tpu.memory_space<vmem>>, vector<1x128x128xf32>
    %73 = vector.shape_cast %72 : vector<1x128x128xf32> to vector<128x128xf32>
    %cst_45 = arith.constant dense<0.000000e+00> : vector<16x128xf32>
    %74 = tpu.matmul %71, %73, %cst_45 {dimension_numbers = #tpu.dot_dimension_numbers<[1], [0], [0], [1], [0, 0, 1, 1], [], []>} : vector<16x128xf32>, vector<128x128xf32>, vector<16x128xf32> -> vector<16x128xf32>
    %c3_46 = arith.constant 3 : index
    %c0_47 = arith.constant 0 : index
    %c0_48 = arith.constant 0 : index
    %75 = vector.load %arg7[%c3_46, %c0_47, %c0_48] : memref<4x1x128xf32, #tpu.memory_space<vmem>>, vector<1x1x128xf32>
    %76 = vector.shape_cast %75 : vector<1x1x128xf32> to vector<1x128xf32>
    %77 = vector.broadcast %76 : vector<1x128xf32> to vector<16x128xf32>
    %78 = arith.addf %74, %77 : vector<16x128xf32>
    %cst_49 = arith.constant 0.000000e+00 : f32
    %79 = vector.broadcast %cst_49 : f32 to vector<16x128xf32>
    %80 = arith.minimumf %78, %79 : vector<16x128xf32>
    %81 = math.exp %80 : vector<16x128xf32>
    %cst_50 = arith.constant 1.75809932 : f32
    %82 = vector.broadcast %cst_50 : f32 to vector<16x128xf32>
    %83 = arith.mulf %82, %81 : vector<16x128xf32>
    %cst_51 = arith.constant 1.75809932 : f32
    %84 = vector.broadcast %cst_51 : f32 to vector<16x128xf32>
    %85 = arith.subf %83, %84 : vector<16x128xf32>
    %cst_52 = arith.constant 0.000000e+00 : f32
    %86 = vector.broadcast %cst_52 : f32 to vector<16x128xf32>
    %87 = arith.cmpf ogt, %78, %86 : vector<16x128xf32>
    %cst_53 = arith.constant 1.05070102 : f32
    %88 = vector.broadcast %cst_53 : f32 to vector<16x128xf32>
    %89 = arith.mulf %88, %78 : vector<16x128xf32>
    %90 = arith.select %87, %89, %85 : vector<16x128xi1>, vector<16x128xf32>
    %91 = arith.addf %90, %71 : vector<16x128xf32>
    %c0_54 = arith.constant 0 : index
    %c0_55 = arith.constant 0 : index
    %92 = vector.load %arg8[%c0_54, %c0_55] : memref<128x16xf32, #tpu.memory_space<vmem>>, vector<128x16xf32>
    %cst_56 = arith.constant dense<0.000000e+00> : vector<16x16xf32>
    %93 = tpu.matmul %91, %92, %cst_56 {dimension_numbers = #tpu.dot_dimension_numbers<[1], [0], [0], [1], [0, 0, 1, 1], [], []>} : vector<16x128xf32>, vector<128x16xf32>, vector<16x16xf32> -> vector<16x16xf32>
    %c0_57 = arith.constant 0 : index
    %c0_58 = arith.constant 0 : index
    %94 = vector.load %arg9[%c0_57, %c0_58] : memref<1x16xf32, #tpu.memory_space<vmem>>, vector<1x16xf32>
    %95 = vector.broadcast %94 : vector<1x16xf32> to vector<16x16xf32>
    %96 = arith.addf %93, %95 : vector<16x16xf32>
    %c0_59 = arith.constant 0 : index
    %c0_60 = arith.constant 0 : index
    %97 = vector.load %arg10[%c0_59, %c0_60] : memref<16x16xf32, #tpu.memory_space<vmem>>, vector<16x16xf32>
    tpu.vector_store %arg10[%c0_59, %c0_60], %96 {strides = array<i32>} : memref<16x16xf32, #tpu.memory_space<vmem>>, vector<16x16xf32>,
    return
  }
  func.func @transform_0(%arg0: i32) -> (i32, i32) {
    %c0_i32 = arith.constant 0 : i32
    %c0_i32_0 = arith.constant 0 : i32
    return %arg0, %c0_i32 : i32, i32
  }
  func.func @transform_1(%arg0: i32) -> (i32, i32) {
    %c0_i32 = arith.constant 0 : i32
    %c0_i32_0 = arith.constant 0 : i32
    return %arg0, %c0_i32 : i32, i32
  }
  func.func @transform_2(%arg0: i32) -> (i32, i32) {
    %c0_i32 = arith.constant 0 : i32
    %c0_i32_0 = arith.constant 0 : i32
    %c0_i32_1 = arith.constant 0 : i32
    return %c0_i32, %c0_i32_0 : i32, i32
  }
  func.func @transform_3(%arg0: i32) -> (i32, i32) {
    %c0_i32 = arith.constant 0 : i32
    %c0_i32_0 = arith.constant 0 : i32
    %c0_i32_1 = arith.constant 0 : i32
    return %c0_i32, %c0_i32_0 : i32, i32
  }
  func.func @transform_4(%arg0: i32) -> (i32, i32) {
    %c0_i32 = arith.constant 0 : i32
    %c0_i32_0 = arith.constant 0 : i32
    %c0_i32_1 = arith.constant 0 : i32
    return %c0_i32, %c0_i32_0 : i32, i32
  }
  func.func @transform_5(%arg0: i32) -> (i32, i32, i32) {
    %c0_i32 = arith.constant 0 : i32
    %c0_i32_0 = arith.constant 0 : i32
    %c0_i32_1 = arith.constant 0 : i32
    %c0_i32_2 = arith.constant 0 : i32
    return %c0_i32, %c0_i32_0, %c0_i32_1 : i32, i32, i32
  }
  func.func @transform_6(%arg0: i32) -> (i32, i32, i32) {
    %c0_i32 = arith.constant 0 : i32
    %c0_i32_0 = arith.constant 0 : i32
    %c0_i32_1 = arith.constant 0 : i32
    %c0_i32_2 = arith.constant 0 : i32
    return %c0_i32, %c0_i32_0, %c0_i32_1 : i32, i32, i32
  }
  func.func @transform_7(%arg0: i32) -> (i32, i32) {
    %c0_i32 = arith.constant 0 : i32
    %c0_i32_0 = arith.constant 0 : i32
    %c0_i32_1 = arith.constant 0 : i32
    return %c0_i32, %c0_i32_0 : i32, i32
  }
  func.func @transform_8(%arg0: i32) -> (i32, i32) {
    %c0_i32 = arith.constant 0 : i32
    %c0_i32_0 = arith.constant 0 : i32
    %c0_i32_1 = arith.constant 0 : i32
    return %c0_i32, %c0_i32_0 : i32, i32
  }
  func.func @transform_9(%arg0: i32) -> (i32, i32) {
    %c0_i32 = arith.constant 0 : i32
    %c0_i32_0 = arith.constant 0 : i32
    return %arg0, %c0_i32 : i32, i32
  }
}

</mosaic_0001>

<llo_original>
// kernel: tpu_custom_call.1
$region0: #{tpu_custom_call.1}
  #allocation0 [shape = 'u32[]', space=smem, size = 0x4, offset = 0x4, fixed_abs, tag = 'smem constant byte address 0x4 - core index']
  #allocation1 [shape = 'u32[144,128]{1,0:T(1,128)}', space=vmem, size = 0x12000, scoped, tag = 'internal scratch']
  %s0 = inlined_call_operand.vmem [shape: f32[64,16], index: 0, kind: input, shape index: {}]
  %s1 = inlined_call_operand.vmem [shape: f32[64,1], index: 1, kind: input, shape index: {}]
  %s2 = inlined_call_operand.vmem [shape: f32[16,128], index: 2, kind: input, shape index: {}]
  %s3 = inlined_call_operand.vmem [shape: f32[1,128], index: 3, kind: input, shape index: {}]
  %s4 = inlined_call_operand.vmem [shape: f32[1,128], index: 4, kind: input, shape index: {}]
  %s5 = inlined_call_operand.hbm [shape: f32[4,128,128], index: 5, kind: input, shape index: {}]
  %s6 = inlined_call_operand.vmem [shape: f32[4,1,128], index: 6, kind: input, shape index: {}]
  %s7 = inlined_call_operand.vmem [shape: f32[128,16], index: 7, kind: input, shape index: {}]
  %s8 = inlined_call_operand.vmem [shape: f32[1,16], index: 8, kind: input, shape index: {}]
  %s9 = inlined_call_operand.vmem [shape: f32[64,16], index: 9, kind: output, shape index: {}]
  %s10 = sld [smem:[#allocation0]]
  $region73: #{tpu_custom_call.1} parent=0
    _
  %s12 = ssub.s32 1, %s10
  %s13 = scalar_select 0, %s12, %s10
  $region1: #{tpu_custom_call.1} parent=0
    #allocation2 [shape = 'u8[262144]{0}', space=vmem, size = 0x40000, scoped, tag = 'input window, operand 5, single buffered']
    #allocation3 [shape = 's32[2]{0}', space=sflag, size = 0x8, scoped, tag = 'scoped memory for tpu_custom_call.1']
    %14 = vsyncpa [#allocation3], 0
    loop: start=0, step=1, limit=6
    $region2: #{tpu_custom_call.1} parent=1 // loop_pre_header
      _
    $region3: #{tpu_custom_call.1} parent=1 // loop_header
      %s16 = sphi 0, %s20
      %p17 = scmp.ge.s32.totalorder %s16, 6
      %s26 = sphi 0, %s28
      %s29 = sphi 0, %s26
      %s30 = sphi 0, %s29
      %s46 = sphi 0, %s30
      %s52 = sphi 0, %s54
      %s55 = sphi 0, %s52
      %s56 = sphi 0, %s55
      %s72 = sphi 0, %s56
      %s76 = sphi 0, %s76
      %s78 = sphi 0, %s76
      %s79 = sphi 0, %s78
      %s93 = sphi 0, %s79
      %s97 = sphi 0, %s97
      %s99 = sphi 0, %s97
      %s100 = sphi 0, %s99
      %s114 = sphi 0, %s100
      %s118 = sphi 0, %s118
      %s120 = sphi 0, %s118
      %s121 = sphi 0, %s120
      %s135 = sphi 0, %s121
      %s139 = sphi 0, %s139
      %s141 = sphi 0, %s139
      %s142 = sphi 0, %s141
      %s156 = sphi 0, %s142
      %s160 = sphi 0, %s160
      %s162 = sphi 0, %s160
      %s163 = sphi 0, %s162
      %s177 = sphi 0, %s163
      %s181 = sphi 0, %s181
      %s183 = sphi 0, %s181
      %s184 = sphi 0, %s183
      %s198 = sphi 0, %s184
      %s202 = sphi 0, %s202
      %s204 = sphi 0, %s202
      %s205 = sphi 0, %s204
      %s219 = sphi 0, %s205
      %s225 = sphi 0, %s227
      %s228 = sphi 0, %s225
      %s229 = sphi 0, %s228
      %s245 = sphi 0, %s229
    $region4: #{tpu_custom_call.1} parent=1 // loop_header_branch
      %19 = sbr.rel (%p17) target = $region8
    $region5: #{tpu_custom_call.1} parent=1 // loop_body
      %s21 = ssub.s32 %s16, 1
      %s22 = ssub.s32 %s16, 2
      %s23 = sadd.s32 %s16, 1
      %s24 = ssub.s32 %s16, %s23
      %p25 = scmp.eq.s32.totalorder %s24, 0
      %s27 = sadd.s32 %s26, 1
      %s28 = scalar_select %p25, %s26, %s27
      %p31 = pneg %p25
      %p32 = scmp.eq.s32.totalorder %s16, 3
      %p33 = por %p31, %p32
      %p34 = scmp.ne.s32.totalorder %s26, %s29
      %p35 = scmp.eq.s32.totalorder %s16, 0
      %p36 = por %p34, %p35
      %p37 = scmp.ne.s32.totalorder %s26, %s29
      %p38 = scmp.eq.s32.totalorder %s21, 3
      %p39 = por %p37, %p38
      %p40 = scmp.ne.s32.totalorder %s29, %s30
      %p41 = scmp.eq.s32.totalorder %s21, 0
      %p42 = por %p40, %p41
      %p43 = scmp.ne.s32.totalorder %s29, %s30
      %p44 = scmp.eq.s32.totalorder %s22, 3
      %p45 = por %p43, %p44
      %p47 = scmp.ne.s32.totalorder %s30, %s46
      %p48 = scmp.eq.s32.totalorder %s22, 0
      %p49 = por %p47, %p48
      %s50 = ssub.s32 %s16, %s23
      %p51 = scmp.eq.s32.totalorder %s50, 0
      %s53 = sadd.s32 %s52, 1
      %s54 = scalar_select %p51, %s52, %s53
      %p57 = pneg %p51
      %p58 = scmp.eq.s32.totalorder %s16, 3
      %p59 = por %p57, %p58
      %p60 = scmp.ne.s32.totalorder %s52, %s55
      %p61 = scmp.eq.s32.totalorder %s16, 0
      %p62 = por %p60, %p61
      %p63 = scmp.ne.s32.totalorder %s52, %s55
      %p64 = scmp.eq.s32.totalorder %s21, 3
      %p65 = por %p63, %p64
      %p66 = scmp.ne.s32.totalorder %s55, %s56
      %p67 = scmp.eq.s32.totalorder %s21, 0
      %p68 = por %p66, %p67
      %p69 = scmp.ne.s32.totalorder %s55, %s56
      %p70 = scmp.eq.s32.totalorder %s22, 3
      %p71 = por %p69, %p70
      %p73 = scmp.ne.s32.totalorder %s56, %s72
      %p74 = scmp.eq.s32.totalorder %s22, 0
      %p75 = por %p73, %p74
      %s77 = sadd.s32 %s76, 1
      %p80 = scmp.eq.s32.totalorder %s16, 3
      %p81 = scmp.ne.s32.totalorder %s76, %s78
      %p82 = scmp.eq.s32.totalorder %s16, 0
      %p83 = por %p81, %p82
      %p84 = scmp.ne.s32.totalorder %s76, %s78
      %p85 = scmp.eq.s32.totalorder %s21, 3
      %p86 = por %p84, %p85
      %p87 = scmp.ne.s32.totalorder %s78, %s79
      %p88 = scmp.eq.s32.totalorder %s21, 0
      %p89 = por %p87, %p88
      %p90 = scmp.ne.s32.totalorder %s78, %s79
      %p91 = scmp.eq.s32.totalorder %s22, 3
      %p92 = por %p90, %p91
      %p94 = scmp.ne.s32.totalorder %s79, %s93
      %p95 = scmp.eq.s32.totalorder %s22, 0
      %p96 = por %p94, %p95
      %s98 = sadd.s32 %s97, 1
      %p101 = scmp.eq.s32.totalorder %s16, 3
      %p102 = scmp.ne.s32.totalorder %s97, %s99
      %p103 = scmp.eq.s32.totalorder %s16, 0
      %p104 = por %p102, %p103
      %p105 = scmp.ne.s32.totalorder %s97, %s99
      %p106 = scmp.eq.s32.totalorder %s21, 3
      %p107 = por %p105, %p106
      %p108 = scmp.ne.s32.totalorder %s99, %s100
      %p109 = scmp.eq.s32.totalorder %s21, 0
      %p110 = por %p108, %p109
      %p111 = scmp.ne.s32.totalorder %s99, %s100
      %p112 = scmp.eq.s32.totalorder %s22, 3
      %p113 = por %p111, %p112
      %p115 = scmp.ne.s32.totalorder %s100, %s114
      %p116 = scmp.eq.s32.totalorder %s22, 0
      %p117 = por %p115, %p116
      %s119 = sadd.s32 %s118, 1
      %p122 = scmp.eq.s32.totalorder %s16, 3
      %p123 = scmp.ne.s32.totalorder %s118, %s120
      %p124 = scmp.eq.s32.totalorder %s16, 0
      %p125 = por %p123, %p124
      %p126 = scmp.ne.s32.totalorder %s118, %s120
      %p127 = scmp.eq.s32.totalorder %s21, 3
      %p128 = por %p126, %p127
      %p129 = scmp.ne.s32.totalorder %s120, %s121
      %p130 = scmp.eq.s32.totalorder %s21, 0
      %p131 = por %p129, %p130
      %p132 = scmp.ne.s32.totalorder %s120, %s121
      %p133 = scmp.eq.s32.totalorder %s22, 3
      %p134 = por %p132, %p133
      %p136 = scmp.ne.s32.totalorder %s121, %s135
      %p137 = scmp.eq.s32.totalorder %s22, 0
      %p138 = por %p136, %p137
      %s140 = sadd.s32 %s139, 1
      %p143 = scmp.eq.s32.totalorder %s16, 3
      %p144 = scmp.ne.s32.totalorder %s139, %s141
      %p145 = scmp.eq.s32.totalorder %s16, 0
      %p146 = por %p144, %p145
      %p147 = scmp.ne.s32.totalorder %s139, %s141
      %p148 = scmp.eq.s32.totalorder %s21, 3
      %p149 = por %p147, %p148
      %p150 = scmp.ne.s32.totalorder %s141, %s142
      %p151 = scmp.eq.s32.totalorder %s21, 0
      %p152 = por %p150, %p151
      %p153 = scmp.ne.s32.totalorder %s141, %s142
      %p154 = scmp.eq.s32.totalorder %s22, 3
      %p155 = por %p153, %p154
      %p157 = scmp.ne.s32.totalorder %s142, %s156
      %p158 = scmp.eq.s32.totalorder %s22, 0
      %p159 = por %p157, %p158
      %s161 = sadd.s32 %s160, 1
      %p164 = scmp.eq.s32.totalorder %s16, 3
      %p165 = scmp.ne.s32.totalorder %s160, %s162
      %p166 = scmp.eq.s32.totalorder %s16, 0
      %p167 = por %p165, %p166
      %p168 = scmp.ne.s32.totalorder %s160, %s162
      %p169 = scmp.eq.s32.totalorder %s21, 3
      %p170 = por %p168, %p169
      %p171 = scmp.ne.s32.totalorder %s162, %s163
      %p172 = scmp.eq.s32.totalorder %s21, 0
      %p173 = por %p171, %p172
      %p174 = scmp.ne.s32.totalorder %s162, %s163
      %p175 = scmp.eq.s32.totalorder %s22, 3
      %p176 = por %p174, %p175
      %p178 = scmp.ne.s32.totalorder %s163, %s177
      %p179 = scmp.eq.s32.totalorder %s22, 0
      %p180 = por %p178, %p179
      %s182 = sadd.s32 %s181, 1
      %p185 = scmp.eq.s32.totalorder %s16, 3
      %p186 = scmp.ne.s32.totalorder %s181, %s183
      %p187 = scmp.eq.s32.totalorder %s16, 0
      %p188 = por %p186, %p187
      %p189 = scmp.ne.s32.totalorder %s181, %s183
      %p190 = scmp.eq.s32.totalorder %s21, 3
      %p191 = por %p189, %p190
      %p192 = scmp.ne.s32.totalorder %s183, %s184
      %p193 = scmp.eq.s32.totalorder %s21, 0
      %p194 = por %p192, %p193
      %p195 = scmp.ne.s32.totalorder %s183, %s184
      %p196 = scmp.eq.s32.totalorder %s22, 3
      %p197 = por %p195, %p196
      %p199 = scmp.ne.s32.totalorder %s184, %s198
      %p200 = scmp.eq.s32.totalorder %s22, 0
      %p201 = por %p199, %p200
      %s203 = sadd.s32 %s202, 1
      %p206 = scmp.eq.s32.totalorder %s16, 3
      %p207 = scmp.ne.s32.totalorder %s202, %s204
      %p208 = scmp.eq.s32.totalorder %s16, 0
      %p209 = por %p207, %p208
      %p210 = scmp.ne.s32.totalorder %s202, %s204
      %p211 = scmp.eq.s32.totalorder %s21, 3
      %p212 = por %p210, %p211
      %p213 = scmp.ne.s32.totalorder %s204, %s205
      %p214 = scmp.eq.s32.totalorder %s21, 0
      %p215 = por %p213, %p214
      %p216 = scmp.ne.s32.totalorder %s204, %s205
      %p217 = scmp.eq.s32.totalorder %s22, 3
      %p218 = por %p216, %p217
      %p220 = scmp.ne.s32.totalorder %s205, %s219
      %p221 = scmp.eq.s32.totalorder %s22, 0
      %p222 = por %p220, %p221
      %s223 = ssub.s32 %s16, %s23
      %p224 = scmp.eq.s32.totalorder %s223, 0
      %s226 = sadd.s32 %s225, 1
      %s227 = scalar_select %p224, %s225, %s226
      %p230 = pneg %p224
      %p231 = scmp.eq.s32.totalorder %s16, 3
      %p232 = por %p230, %p231
      %p233 = scmp.ne.s32.totalorder %s225, %s228
      %p234 = scmp.eq.s32.totalorder %s16, 0
      %p235 = por %p233, %p234
      %p236 = scmp.ne.s32.totalorder %s225, %s228
      %p237 = scmp.eq.s32.totalorder %s21, 3
      %p238 = por %p236, %p237
      %p239 = scmp.ne.s32.totalorder %s228, %s229
      %p240 = scmp.eq.s32.totalorder %s21, 0
      %p241 = por %p239, %p240
      %p242 = scmp.ne.s32.totalorder %s228, %s229
      %p243 = scmp.eq.s32.totalorder %s22, 3
      %p244 = por %p242, %p243
      %p246 = scmp.ne.s32.totalorder %s229, %s245
      %p247 = scmp.eq.s32.totalorder %s22, 0
      %p248 = por %p246, %p247
      %p249 = scmp.le.s32.totalorder 1, %s16
      %p250 = scmp.lt.s32.totalorder %s16, 5
      %p251 = pnand %p249, %p250
      %p252 = pneg %p251
      // Predicated region
      $region9: #{tpu_custom_call.1} parent=5 // pred_check
        _
      $region10: #{tpu_custom_call.1} parent=5 // pred_check_branch
        %254 = sbr.rel (%p251) target = $region12
      $region11: #{tpu_custom_call.1} parent=5 // pred_region
        %s255 = ssub.s32 %s16, 1
        // Predicated region
        $region13: #{tpu_custom_call.1} parent=11 // pred_check
          %p256 = pneg %p89
        $region14: #{tpu_custom_call.1} parent=11 // pred_check_branch
          %258 = sbr.rel (%p256) target = $region16
        $region15: #{tpu_custom_call.1} parent=11 // pred_region
          _
        $region16: #{tpu_custom_call.1} parent=11 // pred_fallthru
          _
        // Predicated region
        $region17: #{tpu_custom_call.1} parent=11 // pred_check
          %p259 = pneg %p110
        $region18: #{tpu_custom_call.1} parent=11 // pred_check_branch
          %261 = sbr.rel (%p259) target = $region20
        $region19: #{tpu_custom_call.1} parent=11 // pred_region
          _
        $region20: #{tpu_custom_call.1} parent=11 // pred_fallthru
          _
        // Predicated region
        $region21: #{tpu_custom_call.1} parent=11 // pred_check
          %p262 = pneg %p131
        $region22: #{tpu_custom_call.1} parent=11 // pred_check_branch
          %264 = sbr.rel (%p262) target = $region24
        $region23: #{tpu_custom_call.1} parent=11 // pred_region
          _
        $region24: #{tpu_custom_call.1} parent=11 // pred_fallthru
          _
        // Predicated region
        $region25: #{tpu_custom_call.1} parent=11 // pred_check
          %p265 = pneg %p152
        $region26: #{tpu_custom_call.1} parent=11 // pred_check_branch
          %267 = sbr.rel (%p265) target = $region28
        $region27: #{tpu_custom_call.1} parent=11 // pred_region
          %s269 = ssub.s32 8192, 8192
          %270 = vsyncadd [#allocation3], %s269
          %s271 = sshll.u32 [#allocation2], 4
          %s272 = int_to_ptr.vmem [resolvable:$true] %s271
          %277 = dma.hbm_to_vmem [thread:$0]  %s5, 8192, %s272, [#allocation3], 128, 128, 8
        $region28: #{tpu_custom_call.1} parent=11 // pred_fallthru
          _
        // Predicated region
        $region29: #{tpu_custom_call.1} parent=11 // pred_check
          %p278 = pneg %p173
        $region30: #{tpu_custom_call.1} parent=11 // pred_check_branch
          %280 = sbr.rel (%p278) target = $region32
        $region31: #{tpu_custom_call.1} parent=11 // pred_region
          _
        $region32: #{tpu_custom_call.1} parent=11 // pred_fallthru
          _
        // Predicated region
        $region33: #{tpu_custom_call.1} parent=11 // pred_check
          %p281 = pneg %p194
        $region34: #{tpu_custom_call.1} parent=11 // pred_check_branch
          %283 = sbr.rel (%p281) target = $region36
        $region35: #{tpu_custom_call.1} parent=11 // pred_region
          _
        $region36: #{tpu_custom_call.1} parent=11 // pred_fallthru
          _
        // Predicated region
        $region37: #{tpu_custom_call.1} parent=11 // pred_check
          %p284 = pneg %p215
        $region38: #{tpu_custom_call.1} parent=11 // pred_check_branch
          %286 = sbr.rel (%p284) target = $region40
        $region39: #{tpu_custom_call.1} parent=11 // pred_region
          _
        $region40: #{tpu_custom_call.1} parent=11 // pred_fallthru
          _
      $region12: #{tpu_custom_call.1} parent=5 // pred_fallthru
        _
      %p287 = scmp.lt.s32.totalorder %s16, 4
      // Predicated region
      $region41: #{tpu_custom_call.1} parent=5 // pred_check
        %p288 = pneg %p287
      $region42: #{tpu_custom_call.1} parent=5 // pred_check_branch
        %290 = sbr.rel (%p288) target = $region44
      $region43: #{tpu_custom_call.1} parent=5 // pred_region
        // Predicated region
        $region45: #{tpu_custom_call.1} parent=43 // pred_check
          %p291 = pneg %p36
        $region46: #{tpu_custom_call.1} parent=43 // pred_check_branch
          %293 = sbr.rel (%p291) target = $region48
        $region47: #{tpu_custom_call.1} parent=43 // pred_region
          %s294 = smul.u32 2, %s16
          %p295 = scmp.lt.s32.totalorder %s294, 7
          %s296 = scalar_select %p295, %s294, 7
          %s297 = smul.addr %s296, 8
          %s298 = scalar_lea.vmem %s0, %s297
          %s299 = smul.u32 2, %s16
        $region48: #{tpu_custom_call.1} parent=43 // pred_fallthru
          _
        // Predicated region
        $region49: #{tpu_custom_call.1} parent=43 // pred_check
          %p300 = pneg %p62
        $region50: #{tpu_custom_call.1} parent=43 // pred_check_branch
          %302 = sbr.rel (%p300) target = $region52
        $region51: #{tpu_custom_call.1} parent=43 // pred_region
          %s303 = smul.u32 2, %s16
          %p304 = scmp.lt.s32.totalorder %s303, 7
          %s305 = scalar_select %p304, %s303, 7
          %s306 = smul.addr %s305, 8
          %s307 = scalar_lea.vmem %s1, %s306
          %s308 = smul.u32 2, %s16
        $region52: #{tpu_custom_call.1} parent=43 // pred_fallthru
          _
      $region44: #{tpu_custom_call.1} parent=5 // pred_fallthru
        _
      %p309 = scmp.le.s32.totalorder 1, %s16
      %p310 = scmp.lt.s32.totalorder %s16, 5
      %p311 = pnand %p309, %p310
      %p312 = pneg %p311
      // Predicated region
      $region53: #{tpu_custom_call.1} parent=5 // pred_check
        _
      $region54: #{tpu_custom_call.1} parent=5 // pred_check_branch
        %314 = sbr.rel (%p311) target = $region56
      $region55: #{tpu_custom_call.1} parent=5 // pred_region
        %s315 = ssub.s32 %s16, 1
        // Predicated region
        $region57: #{tpu_custom_call.1} parent=55 // pred_check
          %p316 = pneg %p152
        $region58: #{tpu_custom_call.1} parent=55 // pred_check_branch
          %318 = sbr.rel (%p316) target = $region60
        $region59: #{tpu_custom_call.1} parent=55 // pred_region
          %319 = dma.done [#allocation3], 8192
        $region60: #{tpu_custom_call.1} parent=55 // pred_fallthru
          _
        %s320 = smul.u32 2, %s21
        %p321 = scmp.lt.s32.totalorder %s320, 7
        %s322 = scalar_select %p321, %s320, 7
        %s323 = smul.addr %s322, 8
        %s324 = scalar_lea.vmem %s0, %s323
        %p325 = pneg %p42
        %p326 = pneg %p39
        %s327 = smul.u32 2, %s21
        %p328 = scmp.lt.s32.totalorder %s327, 7
        %s329 = scalar_select %p328, %s327, 7
        %s330 = smul.addr %s329, 8
        %s331 = scalar_lea.vmem %s1, %s330
        %p332 = pneg %p68
        %p333 = pneg %p65
        %p334 = pneg %p89
        %p335 = pneg %p86
        %p336 = pneg %p110
        %p337 = pneg %p107
        %p338 = pneg %p131
        %p339 = pneg %p128
        %p340 = pneg %p152
        %p341 = pneg %p149
        %p342 = pneg %p173
        %p343 = pneg %p170
        %p344 = pneg %p194
        %p345 = pneg %p191
        %p346 = pneg %p215
        %p347 = pneg %p212
        %p348 = pneg %p241
        %p349 = pneg %p238
        %s350 = smul.u32 2, %s21
        %p351 = scmp.lt.s32.totalorder %s350, 7
        %s352 = scalar_select %p351, %s350, 7
        %s353 = smul.addr %s352, 8
        %s354 = scalar_lea.vmem %s9, %s353
        %s355 = smul.u32 2, %s21
        %p356 = scmp.lt.s32.totalorder %s355, 7
        %s357 = scalar_select %p356, %s355, 7
        %s358 = smul.addr %s357, 8
        %s359 = scalar_lea.vmem %s0, %s358
        %s360 = smul.u32 2, %s21
        %s361 = smul.u32 2, %s21
        %p362 = scmp.lt.s32.totalorder %s361, 7
        %s363 = scalar_select %p362, %s361, 7
        %s364 = smul.addr %s363, 8
        %s365 = scalar_lea.vmem %s1, %s364
        %s366 = smul.u32 2, %s21
        %s367 = smul.u32 2, %s21
        %p368 = scmp.lt.s32.totalorder %s367, 7
        %s369 = scalar_select %p368, %s367, 7
        %s370 = smul.addr %s369, 8
        %s371 = scalar_lea.vmem %s9, %s370
        %s372 = smul.u32 2, %s21
        %v373 = vld [vmem:[%s359] sm:$0xff]
        %v374 = vld [vmem:[%s359 + $0x8] sm:$0xff]
        %v375 = vld [vmem:[%s2] sm:$0xff]
        %v376 = vld [vmem:[%s2 + $0x8] sm:$0xff]
        %v377 = vld [vmem:[%s365] sm:$0xff]
        %v378 = vld [vmem:[%s365 + $0x8] sm:$0xff]
        %v379 = vld [vmem:[%s3] sm:$0x1]
        %381 = vset.pattern.permute.xlu0 0
        %382 = vperm.xlu0 %381, %v377
        %v383 = vpop.permute.xlu0 %382
        %386 = vset.pattern.permute.xlu0 0
        %387 = vperm.xlu0 %386, %v378
        %v388 = vpop.permute.xlu0 %387
        %v391 = vlaneseq
        %v392 = vshrl.u32 %v391, 7
        %v393 = vsub.s32 0, %v392
        %v394 = vrot.slane %v379, %v393
        %v396 = vmul.f32 %v383, %v394
        %v397 = vmul.f32 %v388, %v394
        %vm398 = vcmask 130048
        %v400 = vsel %vm398, %v373, 0
        %v403 = vsel %vm398, %v374, 0
        %405 = vmatprep.subr.mxu0 0.0
        %406 = vmatpush1.msra.mxu0 %v375
        %407 = vmatprep.subr.mxu0 0.0
        %408 = vmatpush1.msra.mxu0 %v376
        %409 = vmatprep.subr.mxu0 0.0
        %410 = vmatpush1.msra.mxu0 0.0
        %411 = vmatprep.subr.mxu0 0.0
        %412 = vmatpush1.msra.mxu0 0.0
        %413 = vmatprep.subr.mxu0 0.0
        %414 = vmatpush1.msra.mxu0 0.0
        %415 = vmatprep.subr.mxu0 0.0
        %416 = vmatpush1.msra.mxu0 0.0
        %417 = vmatprep.subr.mxu0 0.0
        %418 = vmatpush1.msra.mxu0 0.0
        %419 = vmatprep.subr.mxu0 0.0
        %420 = vmatpush1.msra.mxu0 0.0
        %421 = vmatprep.subr.mxu0 0.0
        %422 = vmatpush1.msra.mxu0 0.0
        %423 = vmatprep.subr.mxu0 0.0
        %424 = vmatpush1.msra.mxu0 0.0
        %425 = vmatprep.subr.mxu0 0.0
        %426 = vmatpush1.msra.mxu0 0.0
        %427 = vmatprep.subr.mxu0 0.0
        %428 = vmatpush1.msra.mxu0 0.0
        %429 = vmatprep.subr.mxu0 0.0
        %430 = vmatpush1.msra.mxu0 0.0
        %431 = vmatprep.subr.mxu0 0.0
        %432 = vmatpush1.msra.mxu0 0.0
        %433 = vmatprep.subr.mxu0 0.0
        %434 = vmatpush1.msra.mxu0 0.0
        %435 = vmatprep.subr.mxu0 0.0
        %436 = vmatpush1.msra.mxu0 0.0
        %437 = vmatprep.subr.mxu0 0.0
        %438 = vmatpush1.msra.mxu0 0.0
        %439 = vmatprep.subr.mxu0 0.0
        %440 = vmatpush1.msra.mxu0 0.0
        %441 = vmatprep.subr.mxu0 0.0
        %442 = vmatpush1.msra.mxu0 0.0
        %443 = vmatprep.subr.mxu0 0.0
        %444 = vmatpush1.msra.mxu0 0.0
        %445 = vmatprep.subr.mxu0 0.0
        %446 = vmatpush1.msra.mxu0 0.0
        %447 = vmatprep.subr.mxu0 0.0
        %448 = vmatpush1.msra.mxu0 0.0
        %449 = vmatprep.subr.mxu0 0.0
        %450 = vmatpush1.msra.mxu0 0.0
        %451 = vmatprep.subr.mxu0 0.0
        %452 = vmatpush1.msra.mxu0 0.0
        %453 = vmatprep.subr.mxu0 0.0
        %454 = vmatpush1.msra.mxu0 0.0
        %455 = vmatprep.subr.mxu0 0.0
        %456 = vmatpush1.msra.mxu0 0.0
        %457 = vmatprep.subr.mxu0 0.0
        %458 = vmatpush1.msra.mxu0 0.0
        %459 = vmatprep.subr.mxu0 0.0
        %460 = vmatpush1.msra.mxu0 0.0
        %461 = vmatprep.subr.mxu0 0.0
        %462 = vmatpush1.msra.mxu0 0.0
        %463 = vmatprep.subr.mxu0 0.0
        %464 = vmatpush1.msra.mxu0 0.0
        %465 = vmatprep.subr.mxu0 0.0
        %466 = vmatpush1.msra.mxu0 0.0
        %467 = vmatprep.subr.mxu0 0.0
        %468 = vmatpush1.msra.mxu0 0.0
        %469 = vmatprep.mubr.f32.mxu0 0.0
        %470 = vmatmul.mubr.f32.gmra.mrb[0].mxu0 %v400
        %v471 = vpop.f32.mrb[0].mxu0
        %v472 = vadd.f32 %v396, %v471
        %v473 = vpop.f32.mrb[0].mxu0
        %474 = vmatprep.mubr.f32.mxu0 0.0
        %475 = vmatmul.mubr.f32.gmra.mrb[0].mxu0 %v403
        %v476 = vpop.f32.mrb[0].mxu0
        %v477 = vadd.f32 %v397, %v476
        %v478 = vpop.f32.mrb[0].mxu0
        %479 = vdwg.mxu0
        %v480 = vld [vmem:[%s4] sm:$0x1]
        %v482 = vlaneseq
        %v483 = vshrl.u32 %v482, 7
        %v484 = vsub.s32 0, %v483
        %v485 = vrot.slane %v480, %v484
        %v487 = vadd.f32 %v472, %v485
        %v488 = vadd.f32 %v477, %v485
        %v489 = vld [vmem:[#allocation2] sm:$0xff]
        %v490 = vld [vmem:[#allocation2 + $0x8] sm:$0xff]
        %v491 = vld [vmem:[#allocation2 + $0x10] sm:$0xff]
        %v492 = vld [vmem:[#allocation2 + $0x18] sm:$0xff]
        %v493 = vld [vmem:[#allocation2 + $0x20] sm:$0xff]
        %v494 = vld [vmem:[#allocation2 + $0x28] sm:$0xff]
        %v495 = vld [vmem:[#allocation2 + $0x30] sm:$0xff]
        %v496 = vld [vmem:[#allocation2 + $0x38] sm:$0xff]
        %v497 = vld [vmem:[#allocation2 + $0x40] sm:$0xff]
        %v498 = vld [vmem:[#allocation2 + $0x48] sm:$0xff]
        %v499 = vld [vmem:[#allocation2 + $0x50] sm:$0xff]
        %v500 = vld [vmem:[#allocation2 + $0x58] sm:$0xff]
        %v501 = vld [vmem:[#allocation2 + $0x60] sm:$0xff]
        %v502 = vld [vmem:[#allocation2 + $0x68] sm:$0xff]
        %v503 = vld [vmem:[#allocation2 + $0x70] sm:$0xff]
        %v504 = vld [vmem:[#allocation2 + $0x78] sm:$0xff]
        %v505 = vld [vmem:[%s6] sm:$0x1]
        %v507 = vlaneseq
        %v508 = vshrl.u32 %v507, 7
        %v509 = vsub.s32 0, %v508
        %v510 = vrot.slane %v505, %v509
        %512 = vmatprep.subr.mxu0 0.0
        %513 = vmatpush1.msra.mxu0 %v489
        %514 = vmatprep.subr.mxu0 0.0
        %515 = vmatpush1.msra.mxu0 %v490
        %516 = vmatprep.subr.mxu0 0.0
        %517 = vmatpush1.msra.mxu0 %v491
        %518 = vmatprep.subr.mxu0 0.0
        %519 = vmatpush1.msra.mxu0 %v492
        %520 = vmatprep.subr.mxu0 0.0
        %521 = vmatpush1.msra.mxu0 %v493
        %522 = vmatprep.subr.mxu0 0.0
        %523 = vmatpush1.msra.mxu0 %v494
        %524 = vmatprep.subr.mxu0 0.0
        %525 = vmatpush1.msra.mxu0 %v495
        %526 = vmatprep.subr.mxu0 0.0
        %527 = vmatpush1.msra.mxu0 %v496
        %528 = vmatprep.subr.mxu0 0.0
        %529 = vmatpush1.msra.mxu0 %v497
        %530 = vmatprep.subr.mxu0 0.0
        %531 = vmatpush1.msra.mxu0 %v498
        %532 = vmatprep.subr.mxu0 0.0
        %533 = vmatpush1.msra.mxu0 %v499
        %534 = vmatprep.subr.mxu0 0.0
        %535 = vmatpush1.msra.mxu0 %v500
        %536 = vmatprep.subr.mxu0 0.0
        %537 = vmatpush1.msra.mxu0 %v501
        %538 = vmatprep.subr.mxu0 0.0
        %539 = vmatpush1.msra.mxu0 %v502
        %540 = vmatprep.subr.mxu0 0.0
        %541 = vmatpush1.msra.mxu0 %v503
        %542 = vmatprep.subr.mxu0 0.0
        %543 = vmatpush1.msra.mxu0 %v504
        %544 = vmatprep.subr.mxu0 0.0
        %545 = vmatpush1.msra.mxu0 0.0
        %546 = vmatprep.subr.mxu0 0.0
        %547 = vmatpush1.msra.mxu0 0.0
        %548 = vmatprep.subr.mxu0 0.0
        %549 = vmatpush1.msra.mxu0 0.0
        %550 = vmatprep.subr.mxu0 0.0
        %551 = vmatpush1.msra.mxu0 0.0
        %552 = vmatprep.subr.mxu0 0.0
        %553 = vmatpush1.msra.mxu0 0.0
        %554 = vmatprep.subr.mxu0 0.0
        %555 = vmatpush1.msra.mxu0 0.0
        %556 = vmatprep.subr.mxu0 0.0
        %557 = vmatpush1.msra.mxu0 0.0
        %558 = vmatprep.subr.mxu0 0.0
        %559 = vmatpush1.msra.mxu0 0.0
        %560 = vmatprep.subr.mxu0 0.0
        %561 = vmatpush1.msra.mxu0 0.0
        %562 = vmatprep.subr.mxu0 0.0
        %563 = vmatpush1.msra.mxu0 0.0
        %564 = vmatprep.subr.mxu0 0.0
        %565 = vmatpush1.msra.mxu0 0.0
        %566 = vmatprep.subr.mxu0 0.0
        %567 = vmatpush1.msra.mxu0 0.0
        %568 = vmatprep.subr.mxu0 0.0
        %569 = vmatpush1.msra.mxu0 0.0
        %570 = vmatprep.subr.mxu0 0.0
        %571 = vmatpush1.msra.mxu0 0.0
        %572 = vmatprep.subr.mxu0 0.0
        %573 = vmatpush1.msra.mxu0 0.0
        %574 = vmatprep.subr.mxu0 0.0
        %575 = vmatpush1.msra.mxu0 0.0
        %576 = vmatprep.mubr.f32.mxu0 0.0
        %577 = vmatmul.mubr.f32.gmra.mrb[0].mxu0 %v487
        %v578 = vpop.f32.mrb[0].mxu0
        %v579 = vadd.f32 %v510, %v578
        %v580 = vpop.f32.mrb[0].mxu0
        %581 = vmatprep.mubr.f32.mxu0 0.0
        %582 = vmatmul.mubr.f32.gmra.mrb[0].mxu0 %v488
        %v583 = vpop.f32.mrb[0].mxu0
        %v584 = vadd.f32 %v510, %v583
        %v585 = vpop.f32.mrb[0].mxu0
        %586 = vdwg.mxu0
        %v587 = vmin.f32 %v579, 0.0
        %v588 = vmin.f32 %v584, 0.0
        %v589 = vmul.f32 %v587, 1.442695
        %v590 = vpow.pop %v589
        %v591 = vmul.f32 %v588, 1.442695
        %v592 = vpow.pop %v591
        %v593 = vmul.f32 %v590, 1.7580993
        %v594 = vmul.f32 %v592, 1.7580993
        %v595 = vsub.f32 %v593, 1.7580993
        %v596 = vsub.f32 %v594, 1.7580993
        %vm597 = vcmp.gt.f32.partialorder %v579, 0.0
        %vm598 = vcmp.gt.f32.partialorder %v584, 0.0
        %v599 = vmul.f32 %v579, 1.050701
        %v600 = vmul.f32 %v584, 1.050701
        %v601 = vsel %vm597, %v599, %v595
        %v602 = vsel %vm598, %v600, %v596
        %v603 = vadd.f32 %v601, %v487
        %v604 = vadd.f32 %v602, %v488
        %s605 = scalar_lea.vmem [#allocation2], 128
        %v606 = vld [vmem:[%s605] sm:$0xff]
        %v607 = vld [vmem:[%s605 + $0x8] sm:$0xff]
        %v608 = vld [vmem:[%s605 + $0x10] sm:$0xff]
        %v609 = vld [vmem:[%s605 + $0x18] sm:$0xff]
        %v610 = vld [vmem:[%s605 + $0x20] sm:$0xff]
        %v611 = vld [vmem:[%s605 + $0x28] sm:$0xff]
        %v612 = vld [vmem:[%s605 + $0x30] sm:$0xff]
        %v613 = vld [vmem:[%s605 + $0x38] sm:$0xff]
        %v614 = vld [vmem:[%s605 + $0x40] sm:$0xff]
        %v615 = vld [vmem:[%s605 + $0x48] sm:$0xff]
        %v616 = vld [vmem:[%s605 + $0x50] sm:$0xff]
        %v617 = vld [vmem:[%s605 + $0x58] sm:$0xff]
        %v618 = vld [vmem:[%s605 + $0x60] sm:$0xff]
        %v619 = vld [vmem:[%s605 + $0x68] sm:$0xff]
        %v620 = vld [vmem:[%s605 + $0x70] sm:$0xff]
        %v621 = vld [vmem:[%s605 + $0x78] sm:$0xff]
        %s622 = scalar_lea.vmem %s6, 1
        %v623 = vld [vmem:[%s622] sm:$0x1]
        %v625 = vlaneseq
        %v626 = vshrl.u32 %v625, 7
        %v627 = vsub.s32 0, %v626
        %v628 = vrot.slane %v623, %v627
        %630 = vmatprep.subr.mxu0 0.0
        %631 = vmatpush1.msra.mxu0 %v606
        %632 = vmatprep.subr.mxu0 0.0
        %633 = vmatpush1.msra.mxu0 %v607
        %634 = vmatprep.subr.mxu0 0.0
        %635 = vmatpush1.msra.mxu0 %v608
        %636 = vmatprep.subr.mxu0 0.0
        %637 = vmatpush1.msra.mxu0 %v609
        %638 = vmatprep.subr.mxu0 0.0
        %639 = vmatpush1.msra.mxu0 %v610
        %640 = vmatprep.subr.mxu0 0.0
        %641 = vmatpush1.msra.mxu0 %v611
        %642 = vmatprep.subr.mxu0 0.0
        %643 = vmatpush1.msra.mxu0 %v612
        %644 = vmatprep.subr.mxu0 0.0
        %645 = vmatpush1.msra.mxu0 %v613
        %646 = vmatprep.subr.mxu0 0.0
        %647 = vmatpush1.msra.mxu0 %v614
        %648 = vmatprep.subr.mxu0 0.0
        %649 = vmatpush1.msra.mxu0 %v615
        %650 = vmatprep.subr.mxu0 0.0
        %651 = vmatpush1.msra.mxu0 %v616
        %652 = vmatprep.subr.mxu0 0.0
        %653 = vmatpush1.msra.mxu0 %v617
        %654 = vmatprep.subr.mxu0 0.0
        %655 = vmatpush1.msra.mxu0 %v618
        %656 = vmatprep.subr.mxu0 0.0
        %657 = vmatpush1.msra.mxu0 %v619
        %658 = vmatprep.subr.mxu0 0.0
        %659 = vmatpush1.msra.mxu0 %v620
        %660 = vmatprep.subr.mxu0 0.0
        %661 = vmatpush1.msra.mxu0 %v621
        %662 = vmatprep.subr.mxu0 0.0
        %663 = vmatpush1.msra.mxu0 0.0
        %664 = vmatprep.subr.mxu0 0.0
        %665 = vmatpush1.msra.mxu0 0.0
        %666 = vmatprep.subr.mxu0 0.0
        %667 = vmatpush1.msra.mxu0 0.0
        %668 = vmatprep.subr.mxu0 0.0
        %669 = vmatpush1.msra.mxu0 0.0
        %670 = vmatprep.subr.mxu0 0.0
        %671 = vmatpush1.msra.mxu0 0.0
        %672 = vmatprep.subr.mxu0 0.0
        %673 = vmatpush1.msra.mxu0 0.0
        %674 = vmatprep.subr.mxu0 0.0
        %675 = vmatpush1.msra.mxu0 0.0
        %676 = vmatprep.subr.mxu0 0.0
        %677 = vmatpush1.msra.mxu0 0.0
        %678 = vmatprep.subr.mxu0 0.0
        %679 = vmatpush1.msra.mxu0 0.0
        %680 = vmatprep.subr.mxu0 0.0
        %681 = vmatpush1.msra.mxu0 0.0
        %682 = vmatprep.subr.mxu0 0.0
        %683 = vmatpush1.msra.mxu0 0.0
        %684 = vmatprep.subr.mxu0 0.0
        %685 = vmatpush1.msra.mxu0 0.0
        %686 = vmatprep.subr.mxu0 0.0
        %687 = vmatpush1.msra.mxu0 0.0
        %688 = vmatprep.subr.mxu0 0.0
        %689 = vmatpush1.msra.mxu0 0.0
        %690 = vmatprep.subr.mxu0 0.0
        %691 = vmatpush1.msra.mxu0 0.0
        %692 = vmatprep.subr.mxu0 0.0
        %693 = vmatpush1.msra.mxu0 0.0
        %694 = vmatprep.mubr.f32.mxu0 0.0
        %695 = vmatmul.mubr.f32.gmra.mrb[0].mxu0 %v603
        %v696 = vpop.f32.mrb[0].mxu0
        %v697 = vadd.f32 %v628, %v696
        %v698 = vpop.f32.mrb[0].mxu0
        %699 = vmatprep.mubr.f32.mxu0 0.0
        %700 = vmatmul.mubr.f32.gmra.mrb[0].mxu0 %v604
        %v701 = vpop.f32.mrb[0].mxu0
        %v702 = vadd.f32 %v628, %v701
        %v703 = vpop.f32.mrb[0].mxu0
        %704 = vdwg.mxu0
        %v705 = vmin.f32 %v697, 0.0
        %v706 = vmin.f32 %v702, 0.0
        %v707 = vmul.f32 %v705, 1.442695
        %v708 = vpow.pop %v707
        %v709 = vmul.f32 %v706, 1.442695
        %v710 = vpow.pop %v709
        %v711 = vmul.f32 %v708, 1.7580993
        %v712 = vmul.f32 %v710, 1.7580993
        %v713 = vsub.f32 %v711, 1.7580993
        %v714 = vsub.f32 %v712, 1.7580993
        %vm715 = vcmp.gt.f32.partialorder %v697, 0.0
        %vm716 = vcmp.gt.f32.partialorder %v702, 0.0
        %v717 = vmul.f32 %v697, 1.050701
        %v718 = vmul.f32 %v702, 1.050701
        %v719 = vsel %vm715, %v717, %v713
        %v720 = vsel %vm716, %v718, %v714
        %v721 = vadd.f32 %v719, %v603
        %v722 = vadd.f32 %v720, %v604
        %s723 = scalar_lea.vmem [#allocation2], 256
        %v724 = vld [vmem:[%s723] sm:$0xff]
        %v725 = vld [vmem:[%s723 + $0x8] sm:$0xff]
        %v726 = vld [vmem:[%s723 + $0x10] sm:$0xff]
        %v727 = vld [vmem:[%s723 + $0x18] sm:$0xff]
        %v728 = vld [vmem:[%s723 + $0x20] sm:$0xff]
        %v729 = vld [vmem:[%s723 + $0x28] sm:$0xff]
        %v730 = vld [vmem:[%s723 + $0x30] sm:$0xff]
        %v731 = vld [vmem:[%s723 + $0x38] sm:$0xff]
        %v732 = vld [vmem:[%s723 + $0x40] sm:$0xff]
        %v733 = vld [vmem:[%s723 + $0x48] sm:$0xff]
        %v734 = vld [vmem:[%s723 + $0x50] sm:$0xff]
        %v735 = vld [vmem:[%s723 + $0x58] sm:$0xff]
        %v736 = vld [vmem:[%s723 + $0x60] sm:$0xff]
        %v737 = vld [vmem:[%s723 + $0x68] sm:$0xff]
        %v738 = vld [vmem:[%s723 + $0x70] sm:$0xff]
        %v739 = vld [vmem:[%s723 + $0x78] sm:$0xff]
        %s740 = scalar_lea.vmem %s6, 2
        %v741 = vld [vmem:[%s740] sm:$0x1]
        %v743 = vlaneseq
        %v744 = vshrl.u32 %v743, 7
        %v745 = vsub.s32 0, %v744
        %v746 = vrot.slane %v741, %v745
        %748 = vmatprep.subr.mxu0 0.0
        %749 = vmatpush1.msra.mxu0 %v724
        %750 = vmatprep.subr.mxu0 0.0
        %751 = vmatpush1.msra.mxu0 %v725
        %752 = vmatprep.subr.mxu0 0.0
        %753 = vmatpush1.msra.mxu0 %v726
        %754 = vmatprep.subr.mxu0 0.0
        %755 = vmatpush1.msra.mxu0 %v727
        %756 = vmatprep.subr.mxu0 0.0
        %757 = vmatpush1.msra.mxu0 %v728
        %758 = vmatprep.subr.mxu0 0.0
        %759 = vmatpush1.msra.mxu0 %v729
        %760 = vmatprep.subr.mxu0 0.0
        %761 = vmatpush1.msra.mxu0 %v730
        %762 = vmatprep.subr.mxu0 0.0
        %763 = vmatpush1.msra.mxu0 %v731
        %764 = vmatprep.subr.mxu0 0.0
        %765 = vmatpush1.msra.mxu0 %v732
        %766 = vmatprep.subr.mxu0 0.0
        %767 = vmatpush1.msra.mxu0 %v733
        %768 = vmatprep.subr.mxu0 0.0
        %769 = vmatpush1.msra.mxu0 %v734
        %770 = vmatprep.subr.mxu0 0.0
        %771 = vmatpush1.msra.mxu0 %v735
        %772 = vmatprep.subr.mxu0 0.0
        %773 = vmatpush1.msra.mxu0 %v736
        %774 = vmatprep.subr.mxu0 0.0
        %775 = vmatpush1.msra.mxu0 %v737
        %776 = vmatprep.subr.mxu0 0.0
        %777 = vmatpush1.msra.mxu0 %v738
        %778 = vmatprep.subr.mxu0 0.0
        %779 = vmatpush1.msra.mxu0 %v739
        %780 = vmatprep.subr.mxu0 0.0
        %781 = vmatpush1.msra.mxu0 0.0
        %782 = vmatprep.subr.mxu0 0.0
        %783 = vmatpush1.msra.mxu0 0.0
        %784 = vmatprep.subr.mxu0 0.0
        %785 = vmatpush1.msra.mxu0 0.0
        %786 = vmatprep.subr.mxu0 0.0
        %787 = vmatpush1.msra.mxu0 0.0
        %788 = vmatprep.subr.mxu0 0.0
        %789 = vmatpush1.msra.mxu0 0.0
        %790 = vmatprep.subr.mxu0 0.0
        %791 = vmatpush1.msra.mxu0 0.0
        %792 = vmatprep.subr.mxu0 0.0
        %793 = vmatpush1.msra.mxu0 0.0
        %794 = vmatprep.subr.mxu0 0.0
        %795 = vmatpush1.msra.mxu0 0.0
        %796 = vmatprep.subr.mxu0 0.0
        %797 = vmatpush1.msra.mxu0 0.0
        %798 = vmatprep.subr.mxu0 0.0
        %799 = vmatpush1.msra.mxu0 0.0
        %800 = vmatprep.subr.mxu0 0.0
        %801 = vmatpush1.msra.mxu0 0.0
        %802 = vmatprep.subr.mxu0 0.0
        %803 = vmatpush1.msra.mxu0 0.0
        %804 = vmatprep.subr.mxu0 0.0
        %805 = vmatpush1.msra.mxu0 0.0
        %806 = vmatprep.subr.mxu0 0.0
        %807 = vmatpush1.msra.mxu0 0.0
        %808 = vmatprep.subr.mxu0 0.0
        %809 = vmatpush1.msra.mxu0 0.0
        %810 = vmatprep.subr.mxu0 0.0
        %811 = vmatpush1.msra.mxu0 0.0
        %812 = vmatprep.mubr.f32.mxu0 0.0
        %813 = vmatmul.mubr.f32.gmra.mrb[0].mxu0 %v721
        %v814 = vpop.f32.mrb[0].mxu0
        %v815 = vadd.f32 %v746, %v814
        %v816 = vpop.f32.mrb[0].mxu0
        %817 = vmatprep.mubr.f32.mxu0 0.0
        %818 = vmatmul.mubr.f32.gmra.mrb[0].mxu0 %v722
        %v819 = vpop.f32.mrb[0].mxu0
        %v820 = vadd.f32 %v746, %v819
        %v821 = vpop.f32.mrb[0].mxu0
        %822 = vdwg.mxu0
        %v823 = vmin.f32 %v815, 0.0
        %v824 = vmin.f32 %v820, 0.0
        %v825 = vmul.f32 %v823, 1.442695
        %v826 = vpow.pop %v825
        %v827 = vmul.f32 %v824, 1.442695
        %v828 = vpow.pop %v827
        %v829 = vmul.f32 %v826, 1.7580993
        %v830 = vmul.f32 %v828, 1.7580993
        %v831 = vsub.f32 %v829, 1.7580993
        %v832 = vsub.f32 %v830, 1.7580993
        %vm833 = vcmp.gt.f32.partialorder %v815, 0.0
        %vm834 = vcmp.gt.f32.partialorder %v820, 0.0
        %v835 = vmul.f32 %v815, 1.050701
        %v836 = vmul.f32 %v820, 1.050701
        %v837 = vsel %vm833, %v835, %v831
        %v838 = vsel %vm834, %v836, %v832
        %v839 = vadd.f32 %v837, %v721
        %v840 = vadd.f32 %v838, %v722
        %s841 = scalar_lea.vmem [#allocation2], 384
        %v842 = vld [vmem:[%s841] sm:$0xff]
        %v843 = vld [vmem:[%s841 + $0x8] sm:$0xff]
        %v844 = vld [vmem:[%s841 + $0x10] sm:$0xff]
        %v845 = vld [vmem:[%s841 + $0x18] sm:$0xff]
        %v846 = vld [vmem:[%s841 + $0x20] sm:$0xff]
        %v847 = vld [vmem:[%s841 + $0x28] sm:$0xff]
        %v848 = vld [vmem:[%s841 + $0x30] sm:$0xff]
        %v849 = vld [vmem:[%s841 + $0x38] sm:$0xff]
        %v850 = vld [vmem:[%s841 + $0x40] sm:$0xff]
        %v851 = vld [vmem:[%s841 + $0x48] sm:$0xff]
        %v852 = vld [vmem:[%s841 + $0x50] sm:$0xff]
        %v853 = vld [vmem:[%s841 + $0x58] sm:$0xff]
        %v854 = vld [vmem:[%s841 + $0x60] sm:$0xff]
        %v855 = vld [vmem:[%s841 + $0x68] sm:$0xff]
        %v856 = vld [vmem:[%s841 + $0x70] sm:$0xff]
        %v857 = vld [vmem:[%s841 + $0x78] sm:$0xff]
        %s858 = scalar_lea.vmem %s6, 3
        %v859 = vld [vmem:[%s858] sm:$0x1]
        %v861 = vlaneseq
        %v862 = vshrl.u32 %v861, 7
        %v863 = vsub.s32 0, %v862
        %v864 = vrot.slane %v859, %v863
        %866 = vmatprep.subr.mxu0 0.0
        %867 = vmatpush1.msra.mxu0 %v842
        %868 = vmatprep.subr.mxu0 0.0
        %869 = vmatpush1.msra.mxu0 %v843
        %870 = vmatprep.subr.mxu0 0.0
        %871 = vmatpush1.msra.mxu0 %v844
        %872 = vmatprep.subr.mxu0 0.0
        %873 = vmatpush1.msra.mxu0 %v845
        %874 = vmatprep.subr.mxu0 0.0
        %875 = vmatpush1.msra.mxu0 %v846
        %876 = vmatprep.subr.mxu0 0.0
        %877 = vmatpush1.msra.mxu0 %v847
        %878 = vmatprep.subr.mxu0 0.0
        %879 = vmatpush1.msra.mxu0 %v848
        %880 = vmatprep.subr.mxu0 0.0
        %881 = vmatpush1.msra.mxu0 %v849
        %882 = vmatprep.subr.mxu0 0.0
        %883 = vmatpush1.msra.mxu0 %v850
        %884 = vmatprep.subr.mxu0 0.0
        %885 = vmatpush1.msra.mxu0 %v851
        %886 = vmatprep.subr.mxu0 0.0
        %887 = vmatpush1.msra.mxu0 %v852
        %888 = vmatprep.subr.mxu0 0.0
        %889 = vmatpush1.msra.mxu0 %v853
        %890 = vmatprep.subr.mxu0 0.0
        %891 = vmatpush1.msra.mxu0 %v854
        %892 = vmatprep.subr.mxu0 0.0
        %893 = vmatpush1.msra.mxu0 %v855
        %894 = vmatprep.subr.mxu0 0.0
        %895 = vmatpush1.msra.mxu0 %v856
        %896 = vmatprep.subr.mxu0 0.0
        %897 = vmatpush1.msra.mxu0 %v857
        %898 = vmatprep.subr.mxu0 0.0
        %899 = vmatpush1.msra.mxu0 0.0
        %900 = vmatprep.subr.mxu0 0.0
        %901 = vmatpush1.msra.mxu0 0.0
        %902 = vmatprep.subr.mxu0 0.0
        %903 = vmatpush1.msra.mxu0 0.0
        %904 = vmatprep.subr.mxu0 0.0
        %905 = vmatpush1.msra.mxu0 0.0
        %906 = vmatprep.subr.mxu0 0.0
        %907 = vmatpush1.msra.mxu0 0.0
        %908 = vmatprep.subr.mxu0 0.0
        %909 = vmatpush1.msra.mxu0 0.0
        %910 = vmatprep.subr.mxu0 0.0
        %911 = vmatpush1.msra.mxu0 0.0
        %912 = vmatprep.subr.mxu0 0.0
        %913 = vmatpush1.msra.mxu0 0.0
        %914 = vmatprep.subr.mxu0 0.0
        %915 = vmatpush1.msra.mxu0 0.0
        %916 = vmatprep.subr.mxu0 0.0
        %917 = vmatpush1.msra.mxu0 0.0
        %918 = vmatprep.subr.mxu0 0.0
        %919 = vmatpush1.msra.mxu0 0.0
        %920 = vmatprep.subr.mxu0 0.0
        %921 = vmatpush1.msra.mxu0 0.0
        %922 = vmatprep.subr.mxu0 0.0
        %923 = vmatpush1.msra.mxu0 0.0
        %924 = vmatprep.subr.mxu0 0.0
        %925 = vmatpush1.msra.mxu0 0.0
        %926 = vmatprep.subr.mxu0 0.0
        %927 = vmatpush1.msra.mxu0 0.0
        %928 = vmatprep.subr.mxu0 0.0
        %929 = vmatpush1.msra.mxu0 0.0
        %930 = vmatprep.mubr.f32.mxu0 0.0
        %931 = vmatmul.mubr.f32.gmra.mrb[0].mxu0 %v839
        %v932 = vpop.f32.mrb[0].mxu0
        %v933 = vadd.f32 %v864, %v932
        %v934 = vpop.f32.mrb[0].mxu0
        %935 = vmatprep.mubr.f32.mxu0 0.0
        %936 = vmatmul.mubr.f32.gmra.mrb[0].mxu0 %v840
        %v937 = vpop.f32.mrb[0].mxu0
        %v938 = vadd.f32 %v864, %v937
        %v939 = vpop.f32.mrb[0].mxu0
        %940 = vdwg.mxu0
        %v941 = vmin.f32 %v933, 0.0
        %v942 = vmin.f32 %v938, 0.0
        %v943 = vmul.f32 %v941, 1.442695
        %v944 = vpow.pop %v943
        %v945 = vmul.f32 %v942, 1.442695
        %v946 = vpow.pop %v945
        %v947 = vmul.f32 %v944, 1.7580993
        %v948 = vmul.f32 %v946, 1.7580993
        %v949 = vsub.f32 %v947, 1.7580993
        %v950 = vsub.f32 %v948, 1.7580993
        %vm951 = vcmp.gt.f32.partialorder %v933, 0.0
        %vm952 = vcmp.gt.f32.partialorder %v938, 0.0
        %v953 = vmul.f32 %v933, 1.050701
        %v954 = vmul.f32 %v938, 1.050701
        %v955 = vsel %vm951, %v953, %v949
        %v956 = vsel %vm952, %v954, %v950
        %v957 = vadd.f32 %v955, %v839
        %v958 = vadd.f32 %v956, %v840
        %v959 = vld [vmem:[%s7] sm:$0xff]
        %v960 = vld [vmem:[%s7 + $0x8] sm:$0xff]
        %v961 = vld [vmem:[%s7 + $0x10] sm:$0xff]
        %v962 = vld [vmem:[%s7 + $0x18] sm:$0xff]
        %v963 = vld [vmem:[%s7 + $0x20] sm:$0xff]
        %v964 = vld [vmem:[%s7 + $0x28] sm:$0xff]
        %v965 = vld [vmem:[%s7 + $0x30] sm:$0xff]
        %v966 = vld [vmem:[%s7 + $0x38] sm:$0xff]
        %v967 = vld [vmem:[%s7 + $0x40] sm:$0xff]
        %v968 = vld [vmem:[%s7 + $0x48] sm:$0xff]
        %v969 = vld [vmem:[%s7 + $0x50] sm:$0xff]
        %v970 = vld [vmem:[%s7 + $0x58] sm:$0xff]
        %v971 = vld [vmem:[%s7 + $0x60] sm:$0xff]
        %v972 = vld [vmem:[%s7 + $0x68] sm:$0xff]
        %v973 = vld [vmem:[%s7 + $0x70] sm:$0xff]
        %v974 = vld [vmem:[%s7 + $0x78] sm:$0xff]
        %v975 = vld [vmem:[%s8] sm:$0x1]
        %v977 = vlaneseq
        %v978 = vshrl.u32 %v977, 7
        %v979 = vsub.s32 0, %v978
        %v980 = vrot.slane %v975, %v979
        %982 = vmatprep.subr.mxu0 0.0
        %983 = vmatpush1.msra.mxu0 %v959
        %984 = vmatprep.subr.mxu0 0.0
        %985 = vmatpush1.msra.mxu0 %v960
        %986 = vmatprep.subr.mxu0 0.0
        %987 = vmatpush1.msra.mxu0 %v961
        %988 = vmatprep.subr.mxu0 0.0
        %989 = vmatpush1.msra.mxu0 %v962
        %990 = vmatprep.subr.mxu0 0.0
        %991 = vmatpush1.msra.mxu0 %v963
        %992 = vmatprep.subr.mxu0 0.0
        %993 = vmatpush1.msra.mxu0 %v964
        %994 = vmatprep.subr.mxu0 0.0
        %995 = vmatpush1.msra.mxu0 %v965
        %996 = vmatprep.subr.mxu0 0.0
        %997 = vmatpush1.msra.mxu0 %v966
        %998 = vmatprep.subr.mxu0 0.0
        %999 = vmatpush1.msra.mxu0 %v967
        %1000 = vmatprep.subr.mxu0 0.0
        %1001 = vmatpush1.msra.mxu0 %v968
        %1002 = vmatprep.subr.mxu0 0.0
        %1003 = vmatpush1.msra.mxu0 %v969
        %1004 = vmatprep.subr.mxu0 0.0
        %1005 = vmatpush1.msra.mxu0 %v970
        %1006 = vmatprep.subr.mxu0 0.0
        %1007 = vmatpush1.msra.mxu0 %v971
        %1008 = vmatprep.subr.mxu0 0.0
        %1009 = vmatpush1.msra.mxu0 %v972
        %1010 = vmatprep.subr.mxu0 0.0
        %1011 = vmatpush1.msra.mxu0 %v973
        %1012 = vmatprep.subr.mxu0 0.0
        %1013 = vmatpush1.msra.mxu0 %v974
        %1014 = vmatprep.subr.mxu0 0.0
        %1015 = vmatpush1.msra.mxu0 0.0
        %1016 = vmatprep.subr.mxu0 0.0
        %1017 = vmatpush1.msra.mxu0 0.0
        %1018 = vmatprep.subr.mxu0 0.0
        %1019 = vmatpush1.msra.mxu0 0.0
        %1020 = vmatprep.subr.mxu0 0.0
        %1021 = vmatpush1.msra.mxu0 0.0
        %1022 = vmatprep.subr.mxu0 0.0
        %1023 = vmatpush1.msra.mxu0 0.0
        %1024 = vmatprep.subr.mxu0 0.0
        %1025 = vmatpush1.msra.mxu0 0.0
        %1026 = vmatprep.subr.mxu0 0.0
        %1027 = vmatpush1.msra.mxu0 0.0
        %1028 = vmatprep.subr.mxu0 0.0
        %1029 = vmatpush1.msra.mxu0 0.0
        %1030 = vmatprep.subr.mxu0 0.0
        %1031 = vmatpush1.msra.mxu0 0.0
        %1032 = vmatprep.subr.mxu0 0.0
        %1033 = vmatpush1.msra.mxu0 0.0
        %1034 = vmatprep.subr.mxu0 0.0
        %1035 = vmatpush1.msra.mxu0 0.0
        %1036 = vmatprep.subr.mxu0 0.0
        %1037 = vmatpush1.msra.mxu0 0.0
        %1038 = vmatprep.subr.mxu0 0.0
        %1039 = vmatpush1.msra.mxu0 0.0
        %1040 = vmatprep.subr.mxu0 0.0
        %1041 = vmatpush1.msra.mxu0 0.0
        %1042 = vmatprep.subr.mxu0 0.0
        %1043 = vmatpush1.msra.mxu0 0.0
        %1044 = vmatprep.subr.mxu0 0.0
        %1045 = vmatpush1.msra.mxu0 0.0
        %1046 = vmatprep.mubr.f32.mxu0 0.0
        %1047 = vmatmul.mubr.f32.gmra.mrb[0].mxu0 %v957
        %v1048 = vpop.f32.mrb[0].mxu0
        %v1049 = vadd.f32 %v980, %v1048
        %v1050 = vpop.f32.mrb[0].mxu0
        %1051 = vmatprep.mubr.f32.mxu0 0.0
        %1052 = vmatmul.mubr.f32.gmra.mrb[0].mxu0 %v958
        %v1053 = vpop.f32.mrb[0].mxu0
        %v1054 = vadd.f32 %v980, %v1053
        %v1055 = vpop.f32.mrb[0].mxu0
        %1056 = vdwg.mxu0
        %1057 = vst.msk [vmem:[%s371] sm:$0xff] %vm398, %v1049
        %1058 = vst.msk [vmem:[%s371 + $0x8] sm:$0xff] %vm398, %v1054
        %s1059 = smul.u32 2, %s21
        %p1060 = scmp.lt.s32.totalorder %s1059, 7
        %s1061 = scalar_select %p1060, %s1059, 7
        %s1062 = smul.addr %s1061, 8
        %s1063 = scalar_lea.vmem %s9, %s1062
        // Predicated region
        $region61: #{tpu_custom_call.1} parent=55 // pred_check
          %p1064 = pneg %p238
        $region62: #{tpu_custom_call.1} parent=55 // pred_check_branch
          %1066 = sbr.rel (%p1064) target = $region64
        $region63: #{tpu_custom_call.1} parent=55 // pred_region
          %s1067 = smul.u32 2, %s21
        $region64: #{tpu_custom_call.1} parent=55 // pred_fallthru
          _
      $region56: #{tpu_custom_call.1} parent=5 // pred_fallthru
        _
      %p1068 = scmp.le.s32.totalorder 2, %s16
      // Predicated region
      $region65: #{tpu_custom_call.1} parent=5 // pred_check
        %p1069 = pneg %p1068
      $region66: #{tpu_custom_call.1} parent=5 // pred_check_branch
        %1071 = sbr.rel (%p1069) target = $region68
      $region67: #{tpu_custom_call.1} parent=5 // pred_region
        %s1072 = ssub.s32 %s16, 2
        // Predicated region
        $region69: #{tpu_custom_call.1} parent=67 // pred_check
          %p1073 = pneg %p244
        $region70: #{tpu_custom_call.1} parent=67 // pred_check_branch
          %1075 = sbr.rel (%p1073) target = $region72
        $region71: #{tpu_custom_call.1} parent=67 // pred_region
          %s1076 = smul.u32 2, %s22
          %p1077 = scmp.lt.s32.totalorder %s1076, 7
          %s1078 = scalar_select %p1077, %s1076, 7
          %s1079 = smul.addr %s1078, 8
          %s1080 = scalar_lea.vmem %s9, %s1079
        $region72: #{tpu_custom_call.1} parent=67 // pred_fallthru
          _
      $region68: #{tpu_custom_call.1} parent=5 // pred_fallthru
        _
    $region6: #{tpu_custom_call.1} parent=1 // loop_footer
      %s20 = sadd.s32 1, %s16
    $region7: #{tpu_custom_call.1} parent=1 // loop_footer_branch
      %15 = sbr.rel target = $region3
    $region8: #{tpu_custom_call.1} parent=1 // loop_exit
      _
    %1081 = vsyncpa [#allocation3], 1
    %s1082 = scalar_lea.sflag [#allocation3], 1
    %1083 = vsyncpa %s1082, 1

</llo_original>
